<compile_context>
chip_gen: v7x
topology: tpu7x:2x2x1
jax: 0.10.0
libtpu: 0.0.40
codegen_flags: <defaults>
</compile_context>

<pallas_src>
import jax
import jax.numpy as jnp
from jax import lax
from jax.experimental import pallas as pl
from jax.experimental.pallas import tpu as pltpu


def mlp_kernel(x_ref,
               w1_ref, b1_ref,
               w2_ref, b2_ref,
               w3_ref, b3_ref,
               w4_ref, b4_ref,
               w5_ref, b5_ref,
               o_ref):
    """Fused forward for one batch tile; all weights fully resident in VMEM."""
    x = x_ref[...]                                              # (bt, D)

    # layer 1: contract x's feature dim with w1's in-dim (trans_b matmul on the
    # MXU), producing activations already transposed: (64, bt).
    h = lax.dot_general(w1_ref[...], x, (((1,), (1,)), ((), ())),
                        preferred_element_type=jnp.float32) + b1_ref[...]
    h = jnp.maximum(h, 0.0)

    # layer 2: (32, 64) @ (64, bt) -> (32, bt)
    h = jnp.dot(w2_ref[...], h, preferred_element_type=jnp.float32) + b2_ref[...]
    h = jnp.maximum(h, 0.0)

    # layer 3: (16, 32) @ (32, bt) -> (16, bt)
    h = jnp.dot(w3_ref[...], h, preferred_element_type=jnp.float32) + b3_ref[...]
    h = jnp.maximum(h, 0.0)

    # layer 4: (8, 16) @ (16, bt) -> (8, bt)
    h = jnp.dot(w4_ref[...], h, preferred_element_type=jnp.float32) + b4_ref[...]
    h = jnp.maximum(h, 0.0)

    # layer 5 (no relu): (1, 8) @ (8, bt) -> (1, bt)  — lane-dense output row
    out = jnp.dot(w5_ref[...], h, preferred_element_type=jnp.float32) + b5_ref[...]
    o_ref[...] = out.astype(o_ref.dtype)


def _round_up(n, m):
    return ((n + m - 1) // m) * m


def mlp_forward(x, params, *, batch_tile=512):
    """x: (B, input_dim) float32.  Returns (B, 1) — matches x.view(-1, 1)."""
    B, D = x.shape
    (w1, b1), (w2, b2), (w3, b3), (w4, b4), (w5, b5) = params

    # Tile: multiple of 128 (full 128-lane vregs; 512 also fills the 256-wide
    # MXU M-dim on v6e/v7x), clamped so tiny batches don't over-pad.
    tile = max(128, min(_round_up(batch_tile, 128), _round_up(B, 128)))
    Bp = _round_up(B, tile)
    if Bp != B:
        x = jnp.pad(x, ((0, Bp - B), (0, 0)))

    grid = (Bp // tile,)

    def rep(a):
        # Whole-array block, same block index every grid step -> stays resident
        # in VMEM (bind ndim via default arg to avoid any late-binding surprise).
        return pl.BlockSpec(a.shape, lambda i, _nd=a.ndim: (0,) * _nd)

    in_specs = [
        pl.BlockSpec((tile, D), lambda i: (i, 0)),   # x, tiled over batch rows
        rep(w1), rep(b1),
        rep(w2), rep(b2),
        rep(w3), rep(b3),
        rep(w4), rep(b4),
        rep(w5), rep(b5),
    ]
    # Lane-dense output: one (1, tile) row per grid step.
    out_spec = pl.BlockSpec((1, tile), lambda i: (0, i))

    out_row = pl.pallas_call(
        mlp_kernel,
        out_shape=jax.ShapeDtypeStruct((1, Bp), jnp.float32),
        grid=grid,
        in_specs=in_specs,
        out_specs=out_spec,
        compiler_params=pltpu.CompilerParams(
            dimension_semantics=("parallel",)),   # shard tiles over 2 TCs (v7x)
    )(x, w1, b1, w2, b2, w3, b3, w4, b4, w5, b5)

    # (1, Bp) -> (Bp, 1) is a contiguous, zero-cost reshape; drop padding rows.
    return out_row.reshape(Bp, 1)[:B]


def init_params(key, input_dim):
    """PyTorch nn.Linear default init: U(-1/sqrt(fan_in), +1/sqrt(fan_in)).

    Weights in native (out_features, in_features) layout; biases as (out, 1).
    """
    dims = [input_dim, 64, 32, 16, 8, 1]
    params = []
    for fan_in, fan_out in zip(dims[:-1], dims[1:]):
        kw, kb, key = jax.random.split(key, 3)
        bound = 1.0 / jnp.sqrt(float(fan_in))
        w = jax.random.uniform(kw, (fan_out, fan_in), jnp.float32, -bound, bound)
        b = jax.random.uniform(kb, (fan_out, 1), jnp.float32, -bound, bound)
        params.append((w, b))
    return params


def mlp_reference(x, params):
    """Plain-JAX reference for correctness checking."""
    h = x
    for i, (w, b) in enumerate(params):
        h = h @ w.T + b[:, 0]
        if i < len(params) - 1:
            h = jnp.maximum(h, 0.0)
    return h.reshape(-1, 1)


if __name__ == "__main__":
    key = jax.random.PRNGKey(0)
    kx, kp = jax.random.split(key)

    batch, input_dim = 16, 32
    x = jax.random.normal(kx, (batch, input_dim), dtype=jnp.float32)
    params = init_params(kp, input_dim)

    out = mlp_forward(x, params)          # small batch -> tile clamps to 128
    out = jax.block_until_ready(out)

    ref = mlp_reference(x, params)
    assert out.shape == (batch, 1), out.shape
    assert jnp.allclose(out, ref, atol=1e-4, rtol=1e-4), "mismatch vs reference"

    print("KERNEL_OK")
</pallas_src>

<mosaic_0001>
module attributes {stable_mosaic.version = 11 : i64} {
  func.func @mlp_kernel(%arg0: i32, %arg1: memref<128x32xf32, #tpu.memory_space<vmem>>, %arg2: memref<64x32xf32, #tpu.memory_space<vmem>>, %arg3: memref<64x1xf32, #tpu.memory_space<vmem>>, %arg4: memref<32x64xf32, #tpu.memory_space<vmem>>, %arg5: memref<32x1xf32, #tpu.memory_space<vmem>>, %arg6: memref<16x32xf32, #tpu.memory_space<vmem>>, %arg7: memref<16x1xf32, #tpu.memory_space<vmem>>, %arg8: memref<8x16xf32, #tpu.memory_space<vmem>>, %arg9: memref<8x1xf32, #tpu.memory_space<vmem>>, %arg10: memref<1x8xf32, #tpu.memory_space<vmem>>, %arg11: memref<1x1xf32, #tpu.memory_space<vmem>>, %arg12: memref<1x128xf32, #tpu.memory_space<vmem>>) attributes {dimension_semantics = [#tpu.dimension_semantics<parallel>], iteration_bounds = array<i64: 1>, scalar_prefetch = 0 : i64, scratch_operands = 0 : i64, tpu.core_type = #tpu.core_type<tc>, window_params = [{transform_indices = @transform_0, window_bounds = array<i64: 128, 32>}, {pipeline_mode = #tpu.pipeline_mode<synchronous>, transform_indices = @transform_1, window_bounds = array<i64: 64, 32>}, {pipeline_mode = #tpu.pipeline_mode<synchronous>, transform_indices = @transform_2, window_bounds = array<i64: 64, 1>}, {pipeline_mode = #tpu.pipeline_mode<synchronous>, transform_indices = @transform_3, window_bounds = array<i64: 32, 64>}, {pipeline_mode = #tpu.pipeline_mode<synchronous>, transform_indices = @transform_4, window_bounds = array<i64: 32, 1>}, {pipeline_mode = #tpu.pipeline_mode<synchronous>, transform_indices = @transform_5, window_bounds = array<i64: 16, 32>}, {pipeline_mode = #tpu.pipeline_mode<synchronous>, transform_indices = @transform_6, window_bounds = array<i64: 16, 1>}, {pipeline_mode = #tpu.pipeline_mode<synchronous>, transform_indices = @transform_7, window_bounds = array<i64: 8, 16>}, {pipeline_mode = #tpu.pipeline_mode<synchronous>, transform_indices = @transform_8, window_bounds = array<i64: 8, 1>}, {pipeline_mode = #tpu.pipeline_mode<synchronous>, transform_indices = @transform_9, window_bounds = array<i64: 1, 8>}, {pipeline_mode = #tpu.pipeline_mode<synchronous>, transform_indices = @transform_10, window_bounds = array<i64: 1, 1>}, {transform_indices = @transform_11, window_bounds = array<i64: 1, 128>}]} {
    %c0 = arith.constant 0 : index
    %c0_0 = arith.constant 0 : index
    %0 = vector.load %arg1[%c0, %c0_0] : memref<128x32xf32, #tpu.memory_space<vmem>>, vector<128x32xf32>
    %c0_1 = arith.constant 0 : index
    %c0_2 = arith.constant 0 : index
    %1 = vector.load %arg2[%c0_1, %c0_2] : memref<64x32xf32, #tpu.memory_space<vmem>>, vector<64x32xf32>
    %cst = arith.constant dense<0.000000e+00> : vector<64x128xf32>
    %2 = tpu.matmul %1, %0, %cst {dimension_numbers = #tpu.dot_dimension_numbers<[1], [1], [0], [0], [0, 0, 1, 0], [], []>} : vector<64x32xf32>, vector<128x32xf32>, vector<64x128xf32> -> vector<64x128xf32>
    %c0_3 = arith.constant 0 : index
    %c0_4 = arith.constant 0 : index
    %3 = vector.load %arg3[%c0_3, %c0_4] : memref<64x1xf32, #tpu.memory_space<vmem>>, vector<64x1xf32>
    %4 = vector.broadcast %3 : vector<64x1xf32> to vector<64x128xf32>
    %5 = arith.addf %2, %4 : vector<64x128xf32>
    %cst_5 = arith.constant 0.000000e+00 : f32
    %6 = vector.broadcast %cst_5 : f32 to vector<64x128xf32>
    %7 = arith.maximumf %5, %6 : vector<64x128xf32>
    %c0_6 = arith.constant 0 : index
    %c0_7 = arith.constant 0 : index
    %8 = vector.load %arg4[%c0_6, %c0_7] : memref<32x64xf32, #tpu.memory_space<vmem>>, vector<32x64xf32>
    %cst_8 = arith.constant dense<0.000000e+00> : vector<32x128xf32>
    %9 = tpu.matmul %8, %7, %cst_8 {dimension_numbers = #tpu.dot_dimension_numbers<[1], [0], [0], [1], [0, 0, 1, 1], [], []>} : vector<32x64xf32>, vector<64x128xf32>, vector<32x128xf32> -> vector<32x128xf32>
    %c0_9 = arith.constant 0 : index
    %c0_10 = arith.constant 0 : index
    %10 = vector.load %arg5[%c0_9, %c0_10] : memref<32x1xf32, #tpu.memory_space<vmem>>, vector<32x1xf32>
    %11 = vector.broadcast %10 : vector<32x1xf32> to vector<32x128xf32>
    %12 = arith.addf %9, %11 : vector<32x128xf32>
    %cst_11 = arith.constant 0.000000e+00 : f32
    %13 = vector.broadcast %cst_11 : f32 to vector<32x128xf32>
    %14 = arith.maximumf %12, %13 : vector<32x128xf32>
    %c0_12 = arith.constant 0 : index
    %c0_13 = arith.constant 0 : index
    %15 = vector.load %arg6[%c0_12, %c0_13] : memref<16x32xf32, #tpu.memory_space<vmem>>, vector<16x32xf32>
    %cst_14 = arith.constant dense<0.000000e+00> : vector<16x128xf32>
    %16 = tpu.matmul %15, %14, %cst_14 {dimension_numbers = #tpu.dot_dimension_numbers<[1], [0], [0], [1], [0, 0, 1, 1], [], []>} : vector<16x32xf32>, vector<32x128xf32>, vector<16x128xf32> -> vector<16x128xf32>
    %c0_15 = arith.constant 0 : index
    %c0_16 = arith.constant 0 : index
    %17 = vector.load %arg7[%c0_15, %c0_16] : memref<16x1xf32, #tpu.memory_space<vmem>>, vector<16x1xf32>
    %18 = vector.broadcast %17 : vector<16x1xf32> to vector<16x128xf32>
    %19 = arith.addf %16, %18 : vector<16x128xf32>
    %cst_17 = arith.constant 0.000000e+00 : f32
    %20 = vector.broadcast %cst_17 : f32 to vector<16x128xf32>
    %21 = arith.maximumf %19, %20 : vector<16x128xf32>
    %c0_18 = arith.constant 0 : index
    %c0_19 = arith.constant 0 : index
    %22 = vector.load %arg8[%c0_18, %c0_19] : memref<8x16xf32, #tpu.memory_space<vmem>>, vector<8x16xf32>
    %cst_20 = arith.constant dense<0.000000e+00> : vector<8x128xf32>
    %23 = tpu.matmul %22, %21, %cst_20 {dimension_numbers = #tpu.dot_dimension_numbers<[1], [0], [0], [1], [0, 0, 1, 1], [], []>} : vector<8x16xf32>, vector<16x128xf32>, vector<8x128xf32> -> vector<8x128xf32>
    %c0_21 = arith.constant 0 : index
    %c0_22 = arith.constant 0 : index
    %24 = vector.load %arg9[%c0_21, %c0_22] : memref<8x1xf32, #tpu.memory_space<vmem>>, vector<8x1xf32>
    %25 = vector.broadcast %24 : vector<8x1xf32> to vector<8x128xf32>
    %26 = arith.addf %23, %25 : vector<8x128xf32>
    %cst_23 = arith.constant 0.000000e+00 : f32
    %27 = vector.broadcast %cst_23 : f32 to vector<8x128xf32>
    %28 = arith.maximumf %26, %27 : vector<8x128xf32>
    %c0_24 = arith.constant 0 : index
    %c0_25 = arith.constant 0 : index
    %29 = vector.load %arg10[%c0_24, %c0_25] : memref<1x8xf32, #tpu.memory_space<vmem>>, vector<1x8xf32>
    %cst_26 = arith.constant dense<0.000000e+00> : vector<1x128xf32>
    %30 = tpu.matmul %29, %28, %cst_26 {dimension_numbers = #tpu.dot_dimension_numbers<[1], [0], [0], [1], [0, 0, 1, 1], [], []>} : vector<1x8xf32>, vector<8x128xf32>, vector<1x128xf32> -> vector<1x128xf32>
    %c0_27 = arith.constant 0 : index
    %c0_28 = arith.constant 0 : index
    %31 = vector.load %arg11[%c0_27, %c0_28] : memref<1x1xf32, #tpu.memory_space<vmem>>, vector<1x1xf32>
    %32 = vector.broadcast %31 : vector<1x1xf32> to vector<1x128xf32>
    %33 = arith.addf %30, %32 : vector<1x128xf32>
    %c0_29 = arith.constant 0 : index
    %c0_30 = arith.constant 0 : index
    %34 = vector.load %arg12[%c0_29, %c0_30] : memref<1x128xf32, #tpu.memory_space<vmem>>, vector<1x128xf32>
    tpu.vector_store %arg12[%c0_29, %c0_30], %33 {strides = array<i32>} : memref<1x128xf32, #tpu.memory_space<vmem>>, vector<1x128xf32>,
    return
  }
  func.func @transform_0(%arg0: i32) -> (i32, i32) {
    %c0_i32 = arith.constant 0 : i32
    %c0_i32_0 = arith.constant 0 : i32
    return %arg0, %c0_i32 : i32, i32
  }
  func.func @transform_1(%arg0: i32) -> (i32, i32) {
    %c0_i32 = arith.constant 0 : i32
    %c0_i32_0 = arith.constant 0 : i32
    %c0_i32_1 = arith.constant 0 : i32
    return %c0_i32, %c0_i32_0 : i32, i32
  }
  func.func @transform_2(%arg0: i32) -> (i32, i32) {
    %c0_i32 = arith.constant 0 : i32
    %c0_i32_0 = arith.constant 0 : i32
    %c0_i32_1 = arith.constant 0 : i32
    return %c0_i32, %c0_i32_0 : i32, i32
  }
  func.func @transform_3(%arg0: i32) -> (i32, i32) {
    %c0_i32 = arith.constant 0 : i32
    %c0_i32_0 = arith.constant 0 : i32
    %c0_i32_1 = arith.constant 0 : i32
    return %c0_i32, %c0_i32_0 : i32, i32
  }
  func.func @transform_4(%arg0: i32) -> (i32, i32) {
    %c0_i32 = arith.constant 0 : i32
    %c0_i32_0 = arith.constant 0 : i32
    %c0_i32_1 = arith.constant 0 : i32
    return %c0_i32, %c0_i32_0 : i32, i32
  }
  func.func @transform_5(%arg0: i32) -> (i32, i32) {
    %c0_i32 = arith.constant 0 : i32
    %c0_i32_0 = arith.constant 0 : i32
    %c0_i32_1 = arith.constant 0 : i32
    return %c0_i32, %c0_i32_0 : i32, i32
  }
  func.func @transform_6(%arg0: i32) -> (i32, i32) {
    %c0_i32 = arith.constant 0 : i32
    %c0_i32_0 = arith.constant 0 : i32
    %c0_i32_1 = arith.constant 0 : i32
    return %c0_i32, %c0_i32_0 : i32, i32
  }
  func.func @transform_7(%arg0: i32) -> (i32, i32) {
    %c0_i32 = arith.constant 0 : i32
    %c0_i32_0 = arith.constant 0 : i32
    %c0_i32_1 = arith.constant 0 : i32
    return %c0_i32, %c0_i32_0 : i32, i32
  }
  func.func @transform_8(%arg0: i32) -> (i32, i32) {
    %c0_i32 = arith.constant 0 : i32
    %c0_i32_0 = arith.constant 0 : i32
    %c0_i32_1 = arith.constant 0 : i32
    return %c0_i32, %c0_i32_0 : i32, i32
  }
  func.func @transform_9(%arg0: i32) -> (i32, i32) {
    %c0_i32 = arith.constant 0 : i32
    %c0_i32_0 = arith.constant 0 : i32
    %c0_i32_1 = arith.constant 0 : i32
    return %c0_i32, %c0_i32_0 : i32, i32
  }
  func.func @transform_10(%arg0: i32) -> (i32, i32) {
    %c0_i32 = arith.constant 0 : i32
    %c0_i32_0 = arith.constant 0 : i32
    %c0_i32_1 = arith.constant 0 : i32
    return %c0_i32, %c0_i32_0 : i32, i32
  }
  func.func @transform_11(%arg0: i32) -> (i32, i32) {
    %c0_i32 = arith.constant 0 : i32
    %c0_i32_0 = arith.constant 0 : i32
    return %c0_i32, %arg0 : i32, i32
  }
}

</mosaic_0001>

<llo_original>
// kernel: tpu_custom_call.1
$region0: #{tpu_custom_call.1}
  #allocation0 [shape = 'u32[]', space=smem, size = 0x4, offset = 0x4, fixed_abs, tag = 'smem constant byte address 0x4 - core index']
  #allocation1 [shape = 'u32[144,128]{1,0:T(1,128)}', space=vmem, size = 0x12000, scoped, tag = 'internal scratch']
  #allocation2 [shape = 'f32[1,1]{1,0:T(1,128)S(1)}', space=vmem, size = 0x200, scoped, tag = 'scoped memory for tpu_custom_call.1']
  %s0 = inlined_call_operand.vmem [shape: f32[128,32], index: 0, kind: input, shape index: {}]
  %s1 = inlined_call_operand.vmem [shape: f32[64,32], index: 1, kind: input, shape index: {}]
  %s2 = inlined_call_operand.vmem [shape: f32[64,1], index: 2, kind: input, shape index: {}]
  %s3 = inlined_call_operand.vmem [shape: f32[32,64], index: 3, kind: input, shape index: {}]
  %s4 = inlined_call_operand.vmem [shape: f32[32,1], index: 4, kind: input, shape index: {}]
  %s5 = inlined_call_operand.vmem [shape: f32[16,32], index: 5, kind: input, shape index: {}]
  %s6 = inlined_call_operand.vmem [shape: f32[16,1], index: 6, kind: input, shape index: {}]
  %s7 = inlined_call_operand.vmem [shape: f32[8,16], index: 7, kind: input, shape index: {}]
  %s8 = inlined_call_operand.vmem [shape: f32[8,1], index: 8, kind: input, shape index: {}]
  %s9 = inlined_call_operand.vmem [shape: f32[1,8], index: 9, kind: input, shape index: {}]
  %s10 = inlined_call_operand.<no memory space> [shape: f32[1,1], index: 10, kind: input, shape index: {}]
  %s11 = inlined_call_operand.hbm [shape: f32[1,128], index: 11, kind: output, shape index: {}]
  %s12 = sld [smem:[#allocation0]]
  $region54: #{tpu_custom_call.1} parent=0
    _
  %s14 = ssub.s32 1, %s12
  %s15 = scalar_select 0, %s14, %s12
  %v16 = vstv %s10
  %17 = vst [vmem:[#allocation2] sm:$0x1] %v16
  $region1: #{tpu_custom_call.1} parent=0
    #allocation3 [shape = 'u8[512]{0}', space=vmem, size = 0x400, scoped, tag = 'output window, operand 0, single buffered']
    #allocation4 [shape = 's32[1]{0}', space=sflag, size = 0x4, scoped, tag = 'scoped memory for tpu_custom_call.1']
    %18 = vsyncpa [#allocation4], 0
    // Predicated region
    $region2: #{tpu_custom_call.1} parent=1 // pred_check
      _
    $region3: #{tpu_custom_call.1} parent=1 // pred_check_branch
      %20 = sbr.rel (0) target = $region5
    $region4: #{tpu_custom_call.1} parent=1 // pred_region
      _
    $region5: #{tpu_custom_call.1} parent=1 // pred_fallthru
      _
    // Predicated region
    $region6: #{tpu_custom_call.1} parent=1 // pred_check
      _
    $region7: #{tpu_custom_call.1} parent=1 // pred_check_branch
      %22 = sbr.rel (0) target = $region9
    $region8: #{tpu_custom_call.1} parent=1 // pred_region
      _
    $region9: #{tpu_custom_call.1} parent=1 // pred_fallthru
      _
    // Predicated region
    $region10: #{tpu_custom_call.1} parent=1 // pred_check
      _
    $region11: #{tpu_custom_call.1} parent=1 // pred_check_branch
      %24 = sbr.rel (0) target = $region13
    $region12: #{tpu_custom_call.1} parent=1 // pred_region
      _
    $region13: #{tpu_custom_call.1} parent=1 // pred_fallthru
      _
    // Predicated region
    $region14: #{tpu_custom_call.1} parent=1 // pred_check
      _
    $region15: #{tpu_custom_call.1} parent=1 // pred_check_branch
      %26 = sbr.rel (0) target = $region17
    $region16: #{tpu_custom_call.1} parent=1 // pred_region
      _
    $region17: #{tpu_custom_call.1} parent=1 // pred_fallthru
      _
    // Predicated region
    $region18: #{tpu_custom_call.1} parent=1 // pred_check
      _
    $region19: #{tpu_custom_call.1} parent=1 // pred_check_branch
      %28 = sbr.rel (0) target = $region21
    $region20: #{tpu_custom_call.1} parent=1 // pred_region
      _
    $region21: #{tpu_custom_call.1} parent=1 // pred_fallthru
      _
    // Predicated region
    $region22: #{tpu_custom_call.1} parent=1 // pred_check
      _
    $region23: #{tpu_custom_call.1} parent=1 // pred_check_branch
      %30 = sbr.rel (0) target = $region25
    $region24: #{tpu_custom_call.1} parent=1 // pred_region
      _
    $region25: #{tpu_custom_call.1} parent=1 // pred_fallthru
      _
    // Predicated region
    $region26: #{tpu_custom_call.1} parent=1 // pred_check
      _
    $region27: #{tpu_custom_call.1} parent=1 // pred_check_branch
      %32 = sbr.rel (0) target = $region29
    $region28: #{tpu_custom_call.1} parent=1 // pred_region
      _
    $region29: #{tpu_custom_call.1} parent=1 // pred_fallthru
      _
    // Predicated region
    $region30: #{tpu_custom_call.1} parent=1 // pred_check
      _
    $region31: #{tpu_custom_call.1} parent=1 // pred_check_branch
      %34 = sbr.rel (0) target = $region33
    $region32: #{tpu_custom_call.1} parent=1 // pred_region
      _
    $region33: #{tpu_custom_call.1} parent=1 // pred_fallthru
      _
    // Predicated region
    $region34: #{tpu_custom_call.1} parent=1 // pred_check
      _
    $region35: #{tpu_custom_call.1} parent=1 // pred_check_branch
      %36 = sbr.rel (0) target = $region37
    $region36: #{tpu_custom_call.1} parent=1 // pred_region
      _
    $region37: #{tpu_custom_call.1} parent=1 // pred_fallthru
      _
    // Predicated region
    $region38: #{tpu_custom_call.1} parent=1 // pred_check
      _
    $region39: #{tpu_custom_call.1} parent=1 // pred_check_branch
      %38 = sbr.rel (0) target = $region41
    $region40: #{tpu_custom_call.1} parent=1 // pred_region
      _
    $region41: #{tpu_custom_call.1} parent=1 // pred_fallthru
      _
    // Predicated region
    $region42: #{tpu_custom_call.1} parent=1 // pred_check
      _
    $region43: #{tpu_custom_call.1} parent=1 // pred_check_branch
      %40 = sbr.rel (0) target = $region45
    $region44: #{tpu_custom_call.1} parent=1 // pred_region
      _
    $region45: #{tpu_custom_call.1} parent=1 // pred_fallthru
      _
    %v41 = vld [vmem:[%s0] sm:$0xff]
    %v42 = vld [vmem:[%s0 + $0x8] sm:$0xff]
    %v43 = vld [vmem:[%s0 + $0x10] sm:$0xff]
    %v44 = vld [vmem:[%s0 + $0x18] sm:$0xff]
    %v45 = vld [vmem:[%s0 + $0x20] sm:$0xff]
    %v46 = vld [vmem:[%s0 + $0x28] sm:$0xff]
    %v47 = vld [vmem:[%s0 + $0x30] sm:$0xff]
    %v48 = vld [vmem:[%s0 + $0x38] sm:$0xff]
    %v49 = vld [vmem:[%s0 + $0x40] sm:$0xff]
    %v50 = vld [vmem:[%s0 + $0x48] sm:$0xff]
    %v51 = vld [vmem:[%s0 + $0x50] sm:$0xff]
    %v52 = vld [vmem:[%s0 + $0x58] sm:$0xff]
    %v53 = vld [vmem:[%s0 + $0x60] sm:$0xff]
    %v54 = vld [vmem:[%s0 + $0x68] sm:$0xff]
    %v55 = vld [vmem:[%s0 + $0x70] sm:$0xff]
    %v56 = vld [vmem:[%s0 + $0x78] sm:$0xff]
    %v57 = vld [vmem:[%s1] sm:$0xff]
    %v58 = vld [vmem:[%s1 + $0x8] sm:$0xff]
    %v59 = vld [vmem:[%s1 + $0x10] sm:$0xff]
    %v60 = vld [vmem:[%s1 + $0x18] sm:$0xff]
    %v61 = vld [vmem:[%s1 + $0x20] sm:$0xff]
    %v62 = vld [vmem:[%s1 + $0x28] sm:$0xff]
    %v63 = vld [vmem:[%s1 + $0x30] sm:$0xff]
    %v64 = vld [vmem:[%s1 + $0x38] sm:$0xff]
    %v65 = vld [vmem:[%s2] sm:$0xff]
    %v66 = vld [vmem:[%s2 + $0x8] sm:$0xff]
    %v67 = vld [vmem:[%s2 + $0x10] sm:$0xff]
    %v68 = vld [vmem:[%s2 + $0x18] sm:$0xff]
    %v69 = vld [vmem:[%s2 + $0x20] sm:$0xff]
    %v70 = vld [vmem:[%s2 + $0x28] sm:$0xff]
    %v71 = vld [vmem:[%s2 + $0x30] sm:$0xff]
    %v72 = vld [vmem:[%s2 + $0x38] sm:$0xff]
    %74 = vset.pattern.permute.xlu0 0
    %75 = vperm.xlu0 %74, %v65
    %v76 = vpop.permute.xlu0 %75
    %79 = vset.pattern.permute.xlu0 0
    %80 = vperm.xlu0 %79, %v66
    %v81 = vpop.permute.xlu0 %80
    %84 = vset.pattern.permute.xlu0 0
    %85 = vperm.xlu0 %84, %v67
    %v86 = vpop.permute.xlu0 %85
    %89 = vset.pattern.permute.xlu0 0
    %90 = vperm.xlu0 %89, %v68
    %v91 = vpop.permute.xlu0 %90
    %94 = vset.pattern.permute.xlu0 0
    %95 = vperm.xlu0 %94, %v69
    %v96 = vpop.permute.xlu0 %95
    %99 = vset.pattern.permute.xlu0 0
    %100 = vperm.xlu0 %99, %v70
    %v101 = vpop.permute.xlu0 %100
    %104 = vset.pattern.permute.xlu0 0
    %105 = vperm.xlu0 %104, %v71
    %v106 = vpop.permute.xlu0 %105
    %109 = vset.pattern.permute.xlu0 0
    %110 = vperm.xlu0 %109, %v72
    %v111 = vpop.permute.xlu0 %110
    %vm113 = vcmask 261120
    %v115 = vsel %vm113, %v57, 0
    %v118 = vsel %vm113, %v58, 0
    %v121 = vsel %vm113, %v59, 0
    %v124 = vsel %vm113, %v60, 0
    %v127 = vsel %vm113, %v61, 0
    %v130 = vsel %vm113, %v62, 0
    %v133 = vsel %vm113, %v63, 0
    %v136 = vsel %vm113, %v64, 0
    %v139 = vsel %vm113, %v41, 0
    %v142 = vsel %vm113, %v42, 0
    %v145 = vsel %vm113, %v43, 0
    %v148 = vsel %vm113, %v44, 0
    %v151 = vsel %vm113, %v45, 0
    %v154 = vsel %vm113, %v46, 0
    %v157 = vsel %vm113, %v47, 0
    %v160 = vsel %vm113, %v48, 0
    %v163 = vsel %vm113, %v49, 0
    %v166 = vsel %vm113, %v50, 0
    %v169 = vsel %vm113, %v51, 0
    %v172 = vsel %vm113, %v52, 0
    %v175 = vsel %vm113, %v53, 0
    %v178 = vsel %vm113, %v54, 0
    %v181 = vsel %vm113, %v55, 0
    %v184 = vsel %vm113, %v56, 0
    %186 = vmatprep.subr.mxu0 0.0
    %187 = vmatpush1.xpose.msra.mxu0 %v139
    %188 = vmatprep.subr.mxu0 0.0
    %189 = vmatpush1.xpose.msra.mxu0 %v142
    %190 = vmatprep.subr.mxu0 0.0
    %191 = vmatpush1.xpose.msra.mxu0 %v145
    %192 = vmatprep.subr.mxu0 0.0
    %193 = vmatpush1.xpose.msra.mxu0 %v148
    %194 = vmatprep.subr.mxu0 0.0
    %195 = vmatpush1.xpose.msra.mxu0 %v151
    %196 = vmatprep.subr.mxu0 0.0
    %197 = vmatpush1.xpose.msra.mxu0 %v154
    %198 = vmatprep.subr.mxu0 0.0
    %199 = vmatpush1.xpose.msra.mxu0 %v157
    %200 = vmatprep.subr.mxu0 0.0
    %201 = vmatpush1.xpose.msra.mxu0 %v160
    %202 = vmatprep.subr.mxu0 0.0
    %203 = vmatpush1.xpose.msra.mxu0 %v163
    %204 = vmatprep.subr.mxu0 0.0
    %205 = vmatpush1.xpose.msra.mxu0 %v166
    %206 = vmatprep.subr.mxu0 0.0
    %207 = vmatpush1.xpose.msra.mxu0 %v169
    %208 = vmatprep.subr.mxu0 0.0
    %209 = vmatpush1.xpose.msra.mxu0 %v172
    %210 = vmatprep.subr.mxu0 0.0
    %211 = vmatpush1.xpose.msra.mxu0 %v175
    %212 = vmatprep.subr.mxu0 0.0
    %213 = vmatpush1.xpose.msra.mxu0 %v178
    %214 = vmatprep.subr.mxu0 0.0
    %215 = vmatpush1.xpose.msra.mxu0 %v181
    %216 = vmatprep.subr.mxu0 0.0
    %217 = vmatpush1.xpose.msra.mxu0 %v184
    %218 = vmatprep.subr.mxu0 0.0
    %219 = vmatpush1.xpose.msra.mxu0 0.0
    %220 = vmatprep.subr.mxu0 0.0
    %221 = vmatpush1.xpose.msra.mxu0 0.0
    %222 = vmatprep.subr.mxu0 0.0
    %223 = vmatpush1.xpose.msra.mxu0 0.0
    %224 = vmatprep.subr.mxu0 0.0
    %225 = vmatpush1.xpose.msra.mxu0 0.0
    %226 = vmatprep.subr.mxu0 0.0
    %227 = vmatpush1.xpose.msra.mxu0 0.0
    %228 = vmatprep.subr.mxu0 0.0
    %229 = vmatpush1.xpose.msra.mxu0 0.0
    %230 = vmatprep.subr.mxu0 0.0
    %231 = vmatpush1.xpose.msra.mxu0 0.0
    %232 = vmatprep.subr.mxu0 0.0
    %233 = vmatpush1.xpose.msra.mxu0 0.0
    %234 = vmatprep.subr.mxu0 0.0
    %235 = vmatpush1.xpose.msra.mxu0 0.0
    %236 = vmatprep.subr.mxu0 0.0
    %237 = vmatpush1.xpose.msra.mxu0 0.0
    %238 = vmatprep.subr.mxu0 0.0
    %239 = vmatpush1.xpose.msra.mxu0 0.0
    %240 = vmatprep.subr.mxu0 0.0
    %241 = vmatpush1.xpose.msra.mxu0 0.0
    %242 = vmatprep.subr.mxu0 0.0
    %243 = vmatpush1.xpose.msra.mxu0 0.0
    %244 = vmatprep.subr.mxu0 0.0
    %245 = vmatpush1.xpose.msra.mxu0 0.0
    %246 = vmatprep.subr.mxu0 0.0
    %247 = vmatpush1.xpose.msra.mxu0 0.0
    %248 = vmatprep.subr.mxu0 0.0
    %249 = vmatpush1.xpose.msra.mxu0 0.0
    %250 = vmatprep.mubr.f32.mxu0 0.0
    %251 = vmatmul.mubr.f32.gmra.mrb[0].mxu0 %v115
    %v252 = vpop.f32.mrb[0].mxu0
    %v253 = vadd.f32 %v76, %v252
    %v254 = vpop.f32.mrb[0].mxu0
    %255 = vmatprep.mubr.f32.mxu0 0.0
    %256 = vmatmul.mubr.f32.gmra.mrb[0].mxu0 %v118
    %v257 = vpop.f32.mrb[0].mxu0
    %v258 = vadd.f32 %v81, %v257
    %v259 = vpop.f32.mrb[0].mxu0
    %260 = vmatprep.mubr.f32.mxu0 0.0
    %261 = vmatmul.mubr.f32.gmra.mrb[0].mxu0 %v121
    %v262 = vpop.f32.mrb[0].mxu0
    %v263 = vadd.f32 %v86, %v262
    %v264 = vpop.f32.mrb[0].mxu0
    %265 = vmatprep.mubr.f32.mxu0 0.0
    %266 = vmatmul.mubr.f32.gmra.mrb[0].mxu0 %v124
    %v267 = vpop.f32.mrb[0].mxu0
    %v268 = vadd.f32 %v91, %v267
    %v269 = vpop.f32.mrb[0].mxu0
    %270 = vmatprep.mubr.f32.mxu0 0.0
    %271 = vmatmul.mubr.f32.gmra.mrb[0].mxu0 %v127
    %v272 = vpop.f32.mrb[0].mxu0
    %v273 = vadd.f32 %v96, %v272
    %v274 = vpop.f32.mrb[0].mxu0
    %275 = vmatprep.mubr.f32.mxu0 0.0
    %276 = vmatmul.mubr.f32.gmra.mrb[0].mxu0 %v130
    %v277 = vpop.f32.mrb[0].mxu0
    %v278 = vadd.f32 %v101, %v277
    %v279 = vpop.f32.mrb[0].mxu0
    %280 = vmatprep.mubr.f32.mxu0 0.0
    %281 = vmatmul.mubr.f32.gmra.mrb[0].mxu0 %v133
    %v282 = vpop.f32.mrb[0].mxu0
    %v283 = vadd.f32 %v106, %v282
    %v284 = vpop.f32.mrb[0].mxu0
    %285 = vmatprep.mubr.f32.mxu0 0.0
    %286 = vmatmul.mubr.f32.gmra.mrb[0].mxu0 %v136
    %v287 = vpop.f32.mrb[0].mxu0
    %v288 = vadd.f32 %v111, %v287
    %v289 = vpop.f32.mrb[0].mxu0
    %290 = vdwg.mxu0
    %v291 = vmax.f32 %v253, 0.0
    %v292 = vmax.f32 %v258, 0.0
    %v293 = vmax.f32 %v263, 0.0
    %v294 = vmax.f32 %v268, 0.0
    %v295 = vmax.f32 %v273, 0.0
    %v296 = vmax.f32 %v278, 0.0
    %v297 = vmax.f32 %v283, 0.0
    %v298 = vmax.f32 %v288, 0.0
    %v299 = vld [vmem:[%s3] sm:$0xff]
    %v300 = vld [vmem:[%s3 + $0x8] sm:$0xff]
    %v301 = vld [vmem:[%s3 + $0x10] sm:$0xff]
    %v302 = vld [vmem:[%s3 + $0x18] sm:$0xff]
    %v303 = vld [vmem:[%s4] sm:$0xff]
    %v304 = vld [vmem:[%s4 + $0x8] sm:$0xff]
    %v305 = vld [vmem:[%s4 + $0x10] sm:$0xff]
    %v306 = vld [vmem:[%s4 + $0x18] sm:$0xff]
    %308 = vset.pattern.permute.xlu0 0
    %309 = vperm.xlu0 %308, %v303
    %v310 = vpop.permute.xlu0 %309
    %313 = vset.pattern.permute.xlu0 0
    %314 = vperm.xlu0 %313, %v304
    %v315 = vpop.permute.xlu0 %314
    %318 = vset.pattern.permute.xlu0 0
    %319 = vperm.xlu0 %318, %v305
    %v320 = vpop.permute.xlu0 %319
    %323 = vset.pattern.permute.xlu0 0
    %324 = vperm.xlu0 %323, %v306
    %v325 = vpop.permute.xlu0 %324
    %vm327 = vcmask 523264
    %v329 = vsel %vm327, %v299, 0
    %v332 = vsel %vm327, %v300, 0
    %v335 = vsel %vm327, %v301, 0
    %v338 = vsel %vm327, %v302, 0
    %340 = vmatprep.subr.mxu0 0.0
    %341 = vmatpush1.msra.mxu0 %v291
    %342 = vmatprep.subr.mxu0 0.0
    %343 = vmatpush1.msra.mxu0 %v292
    %344 = vmatprep.subr.mxu0 0.0
    %345 = vmatpush1.msra.mxu0 %v293
    %346 = vmatprep.subr.mxu0 0.0
    %347 = vmatpush1.msra.mxu0 %v294
    %348 = vmatprep.subr.mxu0 0.0
    %349 = vmatpush1.msra.mxu0 %v295
    %350 = vmatprep.subr.mxu0 0.0
    %351 = vmatpush1.msra.mxu0 %v296
    %352 = vmatprep.subr.mxu0 0.0
    %353 = vmatpush1.msra.mxu0 %v297
    %354 = vmatprep.subr.mxu0 0.0
    %355 = vmatpush1.msra.mxu0 %v298
    %356 = vmatprep.subr.mxu0 0.0
    %357 = vmatpush1.msra.mxu0 0.0
    %358 = vmatprep.subr.mxu0 0.0
    %359 = vmatpush1.msra.mxu0 0.0
    %360 = vmatprep.subr.mxu0 0.0
    %361 = vmatpush1.msra.mxu0 0.0
    %362 = vmatprep.subr.mxu0 0.0
    %363 = vmatpush1.msra.mxu0 0.0
    %364 = vmatprep.subr.mxu0 0.0
    %365 = vmatpush1.msra.mxu0 0.0
    %366 = vmatprep.subr.mxu0 0.0
    %367 = vmatpush1.msra.mxu0 0.0
    %368 = vmatprep.subr.mxu0 0.0
    %369 = vmatpush1.msra.mxu0 0.0
    %370 = vmatprep.subr.mxu0 0.0
    %371 = vmatpush1.msra.mxu0 0.0
    %372 = vmatprep.subr.mxu0 0.0
    %373 = vmatpush1.msra.mxu0 0.0
    %374 = vmatprep.subr.mxu0 0.0
    %375 = vmatpush1.msra.mxu0 0.0
    %376 = vmatprep.subr.mxu0 0.0
    %377 = vmatpush1.msra.mxu0 0.0
    %378 = vmatprep.subr.mxu0 0.0
    %379 = vmatpush1.msra.mxu0 0.0
    %380 = vmatprep.subr.mxu0 0.0
    %381 = vmatpush1.msra.mxu0 0.0
    %382 = vmatprep.subr.mxu0 0.0
    %383 = vmatpush1.msra.mxu0 0.0
    %384 = vmatprep.subr.mxu0 0.0
    %385 = vmatpush1.msra.mxu0 0.0
    %386 = vmatprep.subr.mxu0 0.0
    %387 = vmatpush1.msra.mxu0 0.0
    %388 = vmatprep.subr.mxu0 0.0
    %389 = vmatpush1.msra.mxu0 0.0
    %390 = vmatprep.subr.mxu0 0.0
    %391 = vmatpush1.msra.mxu0 0.0
    %392 = vmatprep.subr.mxu0 0.0
    %393 = vmatpush1.msra.mxu0 0.0
    %394 = vmatprep.subr.mxu0 0.0
    %395 = vmatpush1.msra.mxu0 0.0
    %396 = vmatprep.subr.mxu0 0.0
    %397 = vmatpush1.msra.mxu0 0.0
    %398 = vmatprep.subr.mxu0 0.0
    %399 = vmatpush1.msra.mxu0 0.0
    %400 = vmatprep.subr.mxu0 0.0
    %401 = vmatpush1.msra.mxu0 0.0
    %402 = vmatprep.subr.mxu0 0.0
    %403 = vmatpush1.msra.mxu0 0.0
    %404 = vmatprep.mubr.f32.mxu0 0.0
    %405 = vmatmul.mubr.f32.gmra.mrb[0].mxu0 %v329
    %v406 = vpop.f32.mrb[0].mxu0
    %v407 = vadd.f32 %v310, %v406
    %v408 = vpop.f32.mrb[0].mxu0
    %409 = vmatprep.mubr.f32.mxu0 0.0
    %410 = vmatmul.mubr.f32.gmra.mrb[0].mxu0 %v332
    %v411 = vpop.f32.mrb[0].mxu0
    %v412 = vadd.f32 %v315, %v411
    %v413 = vpop.f32.mrb[0].mxu0
    %414 = vmatprep.mubr.f32.mxu0 0.0
    %415 = vmatmul.mubr.f32.gmra.mrb[0].mxu0 %v335
    %v416 = vpop.f32.mrb[0].mxu0
    %v417 = vadd.f32 %v320, %v416
    %v418 = vpop.f32.mrb[0].mxu0
    %419 = vmatprep.mubr.f32.mxu0 0.0
    %420 = vmatmul.mubr.f32.gmra.mrb[0].mxu0 %v338
    %v421 = vpop.f32.mrb[0].mxu0
    %v422 = vadd.f32 %v325, %v421
    %v423 = vpop.f32.mrb[0].mxu0
    %424 = vdwg.mxu0
    %v425 = vmax.f32 %v407, 0.0
    %v426 = vmax.f32 %v412, 0.0
    %v427 = vmax.f32 %v417, 0.0
    %v428 = vmax.f32 %v422, 0.0
    %v429 = vld [vmem:[%s5] sm:$0xff]
    %v430 = vld [vmem:[%s5 + $0x8] sm:$0xff]
    %v431 = vld [vmem:[%s6] sm:$0xff]
    %v432 = vld [vmem:[%s6 + $0x8] sm:$0xff]
    %434 = vset.pattern.permute.xlu0 0
    %435 = vperm.xlu0 %434, %v431
    %v436 = vpop.permute.xlu0 %435
    %439 = vset.pattern.permute.xlu0 0
    %440 = vperm.xlu0 %439, %v432
    %v441 = vpop.permute.xlu0 %440
    %v444 = vsel %vm113, %v429, 0
    %v447 = vsel %vm113, %v430, 0
    %449 = vmatprep.subr.mxu0 0.0
    %450 = vmatpush1.msra.mxu0 %v425
    %451 = vmatprep.subr.mxu0 0.0
    %452 = vmatpush1.msra.mxu0 %v426
    %453 = vmatprep.subr.mxu0 0.0
    %454 = vmatpush1.msra.mxu0 %v427
    %455 = vmatprep.subr.mxu0 0.0
    %456 = vmatpush1.msra.mxu0 %v428
    %457 = vmatprep.subr.mxu0 0.0
    %458 = vmatpush1.msra.mxu0 0.0
    %459 = vmatprep.subr.mxu0 0.0
    %460 = vmatpush1.msra.mxu0 0.0
    %461 = vmatprep.subr.mxu0 0.0
    %462 = vmatpush1.msra.mxu0 0.0
    %463 = vmatprep.subr.mxu0 0.0
    %464 = vmatpush1.msra.mxu0 0.0
    %465 = vmatprep.subr.mxu0 0.0
    %466 = vmatpush1.msra.mxu0 0.0
    %467 = vmatprep.subr.mxu0 0.0
    %468 = vmatpush1.msra.mxu0 0.0
    %469 = vmatprep.subr.mxu0 0.0
    %470 = vmatpush1.msra.mxu0 0.0
    %471 = vmatprep.subr.mxu0 0.0
    %472 = vmatpush1.msra.mxu0 0.0
    %473 = vmatprep.subr.mxu0 0.0
    %474 = vmatpush1.msra.mxu0 0.0
    %475 = vmatprep.subr.mxu0 0.0
    %476 = vmatpush1.msra.mxu0 0.0
    %477 = vmatprep.subr.mxu0 0.0
    %478 = vmatpush1.msra.mxu0 0.0
    %479 = vmatprep.subr.mxu0 0.0
    %480 = vmatpush1.msra.mxu0 0.0
    %481 = vmatprep.subr.mxu0 0.0
    %482 = vmatpush1.msra.mxu0 0.0
    %483 = vmatprep.subr.mxu0 0.0
    %484 = vmatpush1.msra.mxu0 0.0
    %485 = vmatprep.subr.mxu0 0.0
    %486 = vmatpush1.msra.mxu0 0.0
    %487 = vmatprep.subr.mxu0 0.0
    %488 = vmatpush1.msra.mxu0 0.0
    %489 = vmatprep.subr.mxu0 0.0
    %490 = vmatpush1.msra.mxu0 0.0
    %491 = vmatprep.subr.mxu0 0.0
    %492 = vmatpush1.msra.mxu0 0.0
    %493 = vmatprep.subr.mxu0 0.0
    %494 = vmatpush1.msra.mxu0 0.0
    %495 = vmatprep.subr.mxu0 0.0
    %496 = vmatpush1.msra.mxu0 0.0
    %497 = vmatprep.subr.mxu0 0.0
    %498 = vmatpush1.msra.mxu0 0.0
    %499 = vmatprep.subr.mxu0 0.0
    %500 = vmatpush1.msra.mxu0 0.0
    %501 = vmatprep.subr.mxu0 0.0
    %502 = vmatpush1.msra.mxu0 0.0
    %503 = vmatprep.subr.mxu0 0.0
    %504 = vmatpush1.msra.mxu0 0.0
    %505 = vmatprep.subr.mxu0 0.0
    %506 = vmatpush1.msra.mxu0 0.0
    %507 = vmatprep.subr.mxu0 0.0
    %508 = vmatpush1.msra.mxu0 0.0
    %509 = vmatprep.subr.mxu0 0.0
    %510 = vmatpush1.msra.mxu0 0.0
    %511 = vmatprep.subr.mxu0 0.0
    %512 = vmatpush1.msra.mxu0 0.0
    %513 = vmatprep.mubr.f32.mxu0 0.0
    %514 = vmatmul.mubr.f32.gmra.mrb[0].mxu0 %v444
    %v515 = vpop.f32.mrb[0].mxu0
    %v516 = vadd.f32 %v436, %v515
    %v517 = vpop.f32.mrb[0].mxu0
    %518 = vmatprep.mubr.f32.mxu0 0.0
    %519 = vmatmul.mubr.f32.gmra.mrb[0].mxu0 %v447
    %v520 = vpop.f32.mrb[0].mxu0
    %v521 = vadd.f32 %v441, %v520
    %v522 = vpop.f32.mrb[0].mxu0
    %523 = vdwg.mxu0
    %v524 = vmax.f32 %v516, 0.0
    %v525 = vmax.f32 %v521, 0.0
    %v526 = vld [vmem:[%s7] sm:$0xff]
    %v527 = vld [vmem:[%s8] sm:$0xff]
    %529 = vset.pattern.permute.xlu0 0
    %530 = vperm.xlu0 %529, %v527
    %v531 = vpop.permute.xlu0 %530
    %vm533 = vcmask 130048
    %v535 = vsel %vm533, %v526, 0
    %537 = vmatprep.subr.mxu0 0.0
    %538 = vmatpush1.msra.mxu0 %v524
    %539 = vmatprep.subr.mxu0 0.0
    %540 = vmatpush1.msra.mxu0 %v525
    %541 = vmatprep.subr.mxu0 0.0
    %542 = vmatpush1.msra.mxu0 0.0
    %543 = vmatprep.subr.mxu0 0.0
    %544 = vmatpush1.msra.mxu0 0.0
    %545 = vmatprep.subr.mxu0 0.0
    %546 = vmatpush1.msra.mxu0 0.0
    %547 = vmatprep.subr.mxu0 0.0
    %548 = vmatpush1.msra.mxu0 0.0
    %549 = vmatprep.subr.mxu0 0.0
    %550 = vmatpush1.msra.mxu0 0.0
    %551 = vmatprep.subr.mxu0 0.0
    %552 = vmatpush1.msra.mxu0 0.0
    %553 = vmatprep.subr.mxu0 0.0
    %554 = vmatpush1.msra.mxu0 0.0
    %555 = vmatprep.subr.mxu0 0.0
    %556 = vmatpush1.msra.mxu0 0.0
    %557 = vmatprep.subr.mxu0 0.0
    %558 = vmatpush1.msra.mxu0 0.0
    %559 = vmatprep.subr.mxu0 0.0
    %560 = vmatpush1.msra.mxu0 0.0
    %561 = vmatprep.subr.mxu0 0.0
    %562 = vmatpush1.msra.mxu0 0.0
    %563 = vmatprep.subr.mxu0 0.0
    %564 = vmatpush1.msra.mxu0 0.0
    %565 = vmatprep.subr.mxu0 0.0
    %566 = vmatpush1.msra.mxu0 0.0
    %567 = vmatprep.subr.mxu0 0.0
    %568 = vmatpush1.msra.mxu0 0.0
    %569 = vmatprep.subr.mxu0 0.0
    %570 = vmatpush1.msra.mxu0 0.0
    %571 = vmatprep.subr.mxu0 0.0
    %572 = vmatpush1.msra.mxu0 0.0
    %573 = vmatprep.subr.mxu0 0.0
    %574 = vmatpush1.msra.mxu0 0.0
    %575 = vmatprep.subr.mxu0 0.0
    %576 = vmatpush1.msra.mxu0 0.0
    %577 = vmatprep.subr.mxu0 0.0
    %578 = vmatpush1.msra.mxu0 0.0
    %579 = vmatprep.subr.mxu0 0.0
    %580 = vmatpush1.msra.mxu0 0.0
    %581 = vmatprep.subr.mxu0 0.0
    %582 = vmatpush1.msra.mxu0 0.0
    %583 = vmatprep.subr.mxu0 0.0
    %584 = vmatpush1.msra.mxu0 0.0
    %585 = vmatprep.subr.mxu0 0.0
    %586 = vmatpush1.msra.mxu0 0.0
    %587 = vmatprep.subr.mxu0 0.0
    %588 = vmatpush1.msra.mxu0 0.0
    %589 = vmatprep.subr.mxu0 0.0
    %590 = vmatpush1.msra.mxu0 0.0
    %591 = vmatprep.subr.mxu0 0.0
    %592 = vmatpush1.msra.mxu0 0.0
    %593 = vmatprep.subr.mxu0 0.0
    %594 = vmatpush1.msra.mxu0 0.0
    %595 = vmatprep.subr.mxu0 0.0
    %596 = vmatpush1.msra.mxu0 0.0
    %597 = vmatprep.subr.mxu0 0.0
    %598 = vmatpush1.msra.mxu0 0.0
    %599 = vmatprep.subr.mxu0 0.0
    %600 = vmatpush1.msra.mxu0 0.0
    %601 = vmatprep.mubr.f32.mxu0 0.0
    %602 = vmatmul.mubr.f32.gmra.mrb[0].mxu0 %v535
    %v603 = vpop.f32.mrb[0].mxu0
    %v604 = vadd.f32 %v531, %v603
    %v605 = vpop.f32.mrb[0].mxu0
    %606 = vdwg.mxu0
    %v607 = vmax.f32 %v604, 0.0
    %v608 = vld [vmem:[%s9] sm:$0x1]
    %v609 = vld [vmem:[#allocation2] sm:$0x1]
    %611 = vset.pattern.permute.xlu0 0
    %612 = vperm.xlu0 %611, %v609
    %v613 = vpop.permute.xlu0 %612
    %v615 = vlaneseq
    %v616 = vshrl.u32 %v615, 7
    %v617 = vsub.s32 0, %v616
    %v618 = vrot.slane %v613, %v617
    %vm619 = vcmask 64512
    %v621 = vsel %vm619, %v608, 0
    %623 = vmatprep.subr.mxu0 0.0
    %624 = vmatpush1.msra.mxu0 %v607
    %625 = vmatprep.subr.mxu0 0.0
    %626 = vmatpush1.msra.mxu0 0.0
    %627 = vmatprep.subr.mxu0 0.0
    %628 = vmatpush1.msra.mxu0 0.0
    %629 = vmatprep.subr.mxu0 0.0
    %630 = vmatpush1.msra.mxu0 0.0
    %631 = vmatprep.subr.mxu0 0.0
    %632 = vmatpush1.msra.mxu0 0.0
    %633 = vmatprep.subr.mxu0 0.0
    %634 = vmatpush1.msra.mxu0 0.0
    %635 = vmatprep.subr.mxu0 0.0
    %636 = vmatpush1.msra.mxu0 0.0
    %637 = vmatprep.subr.mxu0 0.0
    %638 = vmatpush1.msra.mxu0 0.0
    %639 = vmatprep.subr.mxu0 0.0
    %640 = vmatpush1.msra.mxu0 0.0
    %641 = vmatprep.subr.mxu0 0.0
    %642 = vmatpush1.msra.mxu0 0.0
    %643 = vmatprep.subr.mxu0 0.0
    %644 = vmatpush1.msra.mxu0 0.0
    %645 = vmatprep.subr.mxu0 0.0
    %646 = vmatpush1.msra.mxu0 0.0
    %647 = vmatprep.subr.mxu0 0.0
    %648 = vmatpush1.msra.mxu0 0.0
    %649 = vmatprep.subr.mxu0 0.0
    %650 = vmatpush1.msra.mxu0 0.0
    %651 = vmatprep.subr.mxu0 0.0
    %652 = vmatpush1.msra.mxu0 0.0
    %653 = vmatprep.subr.mxu0 0.0
    %654 = vmatpush1.msra.mxu0 0.0
    %655 = vmatprep.subr.mxu0 0.0
    %656 = vmatpush1.msra.mxu0 0.0
    %657 = vmatprep.subr.mxu0 0.0
    %658 = vmatpush1.msra.mxu0 0.0
    %659 = vmatprep.subr.mxu0 0.0
    %660 = vmatpush1.msra.mxu0 0.0
    %661 = vmatprep.subr.mxu0 0.0
    %662 = vmatpush1.msra.mxu0 0.0
    %663 = vmatprep.subr.mxu0 0.0
    %664 = vmatpush1.msra.mxu0 0.0
    %665 = vmatprep.subr.mxu0 0.0
    %666 = vmatpush1.msra.mxu0 0.0
    %667 = vmatprep.subr.mxu0 0.0
    %668 = vmatpush1.msra.mxu0 0.0
    %669 = vmatprep.subr.mxu0 0.0
    %670 = vmatpush1.msra.mxu0 0.0
    %671 = vmatprep.subr.mxu0 0.0
    %672 = vmatpush1.msra.mxu0 0.0
    %673 = vmatprep.subr.mxu0 0.0
    %674 = vmatpush1.msra.mxu0 0.0
    %675 = vmatprep.subr.mxu0 0.0
    %676 = vmatpush1.msra.mxu0 0.0
    %677 = vmatprep.subr.mxu0 0.0
    %678 = vmatpush1.msra.mxu0 0.0
    %679 = vmatprep.subr.mxu0 0.0
    %680 = vmatpush1.msra.mxu0 0.0
    %681 = vmatprep.subr.mxu0 0.0
    %682 = vmatpush1.msra.mxu0 0.0
    %683 = vmatprep.subr.mxu0 0.0
    %684 = vmatpush1.msra.mxu0 0.0
    %685 = vmatprep.subr.mxu0 0.0
    %686 = vmatpush1.msra.mxu0 0.0
    %687 = vmatprep.mubr.f32.mxu0 0.0
    %688 = vmatmul.mubr.f32.gmra.mrb[0].mxu0 %v621
    %v689 = vpop.f32.mrb[0].mxu0
    %v690 = vadd.f32 %v618, %v689
    %v691 = vpop.f32.mrb[0].mxu0
    %692 = vdwg.mxu0
    %693 = vst [vmem:[#allocation3] sm:$0x1] %v690
    // Predicated region
    $region46: #{tpu_custom_call.1} parent=1 // pred_check
      _
    $region47: #{tpu_custom_call.1} parent=1 // pred_check_branch
      %695 = sbr.rel (0) target = $region49
    $region48: #{tpu_custom_call.1} parent=1 // pred_region
      %s697 = ssub.s32 16, 16
      %698 = vsyncadd [#allocation4], %s697
      %s700 = sshll.u32 [#allocation3], 4
      %s701 = int_to_ptr.vmem [resolvable:$true] %s700
      %703 = dma.vmem_to_hbm [thread:$0]  %s701, 16, %s11, [#allocation4]
    $region49: #{tpu_custom_call.1} parent=1 // pred_fallthru
      _
    // Predicated region
    $region50: #{tpu_custom_call.1} parent=1 // pred_check
      _
    $region51: #{tpu_custom_call.1} parent=1 // pred_check_branch
      %705 = sbr.rel (0) target = $region53
    $region52: #{tpu_custom_call.1} parent=1 // pred_region
      %706 = dma.done [#allocation4], 16
    $region53: #{tpu_custom_call.1} parent=1 // pred_fallthru
      _
    %707 = vsyncpa [#allocation4], 1

</llo_original>
